<compile_context>
chip_gen: v7x
topology: tpu7x:2x2x1
jax: 0.10.0
libtpu: 0.0.40
codegen_flags: <defaults>
</compile_context>

<pallas_src>
import jax
import jax.numpy as jnp
from jax.experimental import pallas as pl
from jax.experimental.pallas import tpu as pltpu


def _linear_kernel(w_ref, b_ref, x_ref, o_ref):
    """VPU-only Linear(2, 1) on a lane-dense batch tile.

    w_ref: (2,) f32 in SMEM  -- [W[0,0], W[0,1]] (PyTorch (out,in) row 0)
    b_ref: (1,) f32 in SMEM
    x_ref: (2, TB) f32 in VMEM -- features on sublanes, batch on lanes
    o_ref: (1, TB) f32 in VMEM -- lane-dense output
    """
    w0 = w_ref[0]
    w1 = w_ref[1]
    bias = b_ref[0]
    # Two full-width FMAs per 128 batch elements; no MXU involvement.
    o_ref[...] = x_ref[0:1, :] * w0 + x_ref[1:2, :] * w1 + bias


def _round_up(x, m):
    return (x + m - 1) // m * m


def linear_forward(x, w, b, *, max_tile=8192):
    """Forward of nn.Linear(2, 1): y = x @ w.T + b.

    x: (B, 2) f32
    w: (1, 2) f32  (PyTorch (out_features, in_features) convention)
    b: (1,)   f32
    returns (B, 1) f32
    """
    B, K = x.shape
    N, K2 = w.shape
    assert K == 2 and K2 == 2 and N == 1, "kernel is specialized to Linear(2, 1)"

    # Layout plumbing (wrapper side): put the batch on the lane axis.
    x_t = x.astype(jnp.float32).T                      # (K, B)

    # Lane-multiple batch tile; big tiles amortize the ~0.35us/step overhead
    # while a (2, 8192) f32 tile is only 64 KiB (fits v7x VMEM budget easily).
    TB = min(max_tile, _round_up(B, 128))
    Bp = _round_up(B, TB)
    if Bp != B:
        x_t = jnp.pad(x_t, ((0, 0), (0, Bp - B)))       # zero-pad extra lanes

    w_flat = w.reshape(K).astype(jnp.float32)           # (2,) -> SMEM
    b_flat = b.reshape(N).astype(jnp.float32)           # (1,) -> SMEM

    y_t = pl.pallas_call(
        _linear_kernel,
        out_shape=jax.ShapeDtypeStruct((N, Bp), jnp.float32),
        grid_spec=pltpu.PrefetchScalarGridSpec(
            num_scalar_prefetch=0,
            grid=(Bp // TB,),
            in_specs=[
                pl.BlockSpec(memory_space=pltpu.SMEM),          # w (2,)
                pl.BlockSpec(memory_space=pltpu.SMEM),          # b (1,)
                pl.BlockSpec((K, TB), lambda i: (0, i)),        # x_t tile
            ],
            out_specs=pl.BlockSpec((N, TB), lambda i: (0, i)),  # lane-dense out
        ),
        compiler_params=pltpu.CompilerParams(
            # Pure data-parallel over batch tiles -> megacore shards on v7x.
            dimension_semantics=("parallel",),
        ),
    )(w_flat, b_flat, x_t)

    # Strip padding, restore PyTorch's (B, 1) output layout.
    return y_t[:, :B].T


# TODO(synk): train()/test() (SGD, MSELoss, DataLoader) are host-side training
# loops, not part of the forward pass, and are intentionally not implemented.


if __name__ == "__main__":
    key = jax.random.PRNGKey(0)
    k_x, k_w, k_b, k_x2 = jax.random.split(key, 4)

    B, IN, OUT = 8, 2, 1
    x = jax.random.normal(k_x, (B, IN), dtype=jnp.float32)

    # Deterministic init mimicking nn.Linear's U(-1/sqrt(fan_in), 1/sqrt(fan_in)).
    bound = 1.0 / jnp.sqrt(jnp.float32(IN))
    w = jax.random.uniform(k_w, (OUT, IN), minval=-bound, maxval=bound,
                           dtype=jnp.float32)   # (1, 2)
    b = jax.random.uniform(k_b, (OUT,), minval=-bound, maxval=bound,
                           dtype=jnp.float32)   # (1,)

    # Small-batch check.
    y = jax.block_until_ready(linear_forward(x, w, b))
    y_ref = x @ w.T + b
    assert y.shape == (B, OUT)
    assert jnp.allclose(y, y_ref, atol=1e-5, rtol=1e-5)

    # Non-multiple-of-128 batch exercises the pad/slice path.
    B2 = 517
    x2 = jax.random.normal(k_x2, (B2, IN), dtype=jnp.float32)
    y2 = jax.block_until_ready(linear_forward(x2, w, b))
    y2_ref = x2 @ w.T + b
    assert y2.shape == (B2, OUT)
    assert jnp.allclose(y2, y2_ref, atol=1e-5, rtol=1e-5)

    print("KERNEL_OK")
</pallas_src>

<mosaic_0001>
module attributes {stable_mosaic.version = 11 : i64} {
  func.func @_linear_kernel(%arg0: i32, %arg1: memref<2xf32, #tpu.memory_space<smem>>, %arg2: memref<1xf32, #tpu.memory_space<smem>>, %arg3: memref<2x128xf32, #tpu.memory_space<vmem>>, %arg4: memref<1x128xf32, #tpu.memory_space<vmem>>) attributes {dimension_semantics = [#tpu.dimension_semantics<parallel>], iteration_bounds = array<i64: 1>, scalar_prefetch = 0 : i64, scratch_operands = 0 : i64, tpu.core_type = #tpu.core_type<tc>, window_params = [{transform_indices = @transform_0, window_bounds = array<i64: 2>}, {transform_indices = @transform_1, window_bounds = array<i64: 1>}, {transform_indices = @transform_2, window_bounds = array<i64: 2, 128>}, {transform_indices = @transform_3, window_bounds = array<i64: 1, 128>}]} {
    %c0 = arith.constant 0 : index
    %0 = memref.load %arg1[%c0] : memref<2xf32, #tpu.memory_space<smem>>
    %c1 = arith.constant 1 : index
    %1 = memref.load %arg1[%c1] : memref<2xf32, #tpu.memory_space<smem>>
    %c0_0 = arith.constant 0 : index
    %2 = memref.load %arg2[%c0_0] : memref<1xf32, #tpu.memory_space<smem>>
    %c0_1 = arith.constant 0 : index
    %c0_2 = arith.constant 0 : index
    %3 = vector.load %arg3[%c0_1, %c0_2] : memref<2x128xf32, #tpu.memory_space<vmem>>, vector<1x128xf32>
    %4 = vector.broadcast %0 : f32 to vector<1x128xf32>
    %5 = arith.mulf %3, %4 : vector<1x128xf32>
    %c1_3 = arith.constant 1 : index
    %c0_4 = arith.constant 0 : index
    %6 = vector.load %arg3[%c1_3, %c0_4] : memref<2x128xf32, #tpu.memory_space<vmem>>, vector<1x128xf32>
    %7 = vector.broadcast %1 : f32 to vector<1x128xf32>
    %8 = arith.mulf %6, %7 : vector<1x128xf32>
    %9 = arith.addf %5, %8 : vector<1x128xf32>
    %10 = vector.broadcast %2 : f32 to vector<1x128xf32>
    %11 = arith.addf %9, %10 : vector<1x128xf32>
    %c0_5 = arith.constant 0 : index
    %c0_6 = arith.constant 0 : index
    %12 = vector.load %arg4[%c0_5, %c0_6] : memref<1x128xf32, #tpu.memory_space<vmem>>, vector<1x128xf32>
    tpu.vector_store %arg4[%c0_5, %c0_6], %11 {strides = array<i32>} : memref<1x128xf32, #tpu.memory_space<vmem>>, vector<1x128xf32>,
    return
  }
  func.func @transform_0(%arg0: i32) -> i32 {
    %c0_i32 = arith.constant 0 : i32
    %c0_i32_0 = arith.constant 0 : i32
    return %c0_i32 : i32
  }
  func.func @transform_1(%arg0: i32) -> i32 {
    %c0_i32 = arith.constant 0 : i32
    %c0_i32_0 = arith.constant 0 : i32
    return %c0_i32 : i32
  }
  func.func @transform_2(%arg0: i32) -> (i32, i32) {
    %c0_i32 = arith.constant 0 : i32
    %c0_i32_0 = arith.constant 0 : i32
    return %c0_i32, %arg0 : i32, i32
  }
  func.func @transform_3(%arg0: i32) -> (i32, i32) {
    %c0_i32 = arith.constant 0 : i32
    %c0_i32_0 = arith.constant 0 : i32
    return %c0_i32, %arg0 : i32, i32
  }
}

</mosaic_0001>

<llo_original>
// kernel: tpu_custom_call.1
$region0: #{tpu_custom_call.1}
  #allocation0 [shape = 'u32[]', space=smem, size = 0x4, offset = 0x4, fixed_abs, tag = 'smem constant byte address 0x4 - core index']
  #allocation1 [shape = 'u32[144,128]{1,0:T(1,128)}', space=vmem, size = 0x12000, scoped, tag = 'internal scratch']
  #allocation2 [shape = 'f32[1]{0:T(128)S(6)}', space=smem, size = 0x200, scoped, tag = 'scoped memory for tpu_custom_call.1']
  %s0 = inlined_call_operand.vmem [shape: f32[2], index: 0, kind: input, shape index: {}]
  %s1 = inlined_call_operand.<no memory space> [shape: f32[1], index: 1, kind: input, shape index: {}]
  %s2 = inlined_call_operand.vmem [shape: f32[2,128], index: 2, kind: input, shape index: {}]
  %s3 = inlined_call_operand.hbm [shape: f32[1,128], index: 3, kind: output, shape index: {}]
  %s4 = sld [smem:[#allocation0]]
  $region26: #{tpu_custom_call.1} parent=0
    _
  %s6 = ssub.s32 1, %s4
  %s7 = scalar_select 0, %s6, %s4
  %8 = sst [smem:[#allocation2]] %s1
  $region1: #{tpu_custom_call.1} parent=0
    #allocation3 [shape = 'u8[512]{0}', space=smem, size = 0x200, scoped, tag = 'input window, operand 0, single buffered']
    #allocation4 [shape = 's32[1]{0}', space=sflag, size = 0x4, scoped, tag = 'scoped memory for tpu_custom_call.1']
    #allocation5 [shape = 's32[1]{0}', space=sflag, size = 0x4, scoped, tag = 'scoped memory for tpu_custom_call.1']
    #allocation6 [shape = 'u8[512]{0}', space=vmem, size = 0x400, scoped, tag = 'output window, operand 0, single buffered']
    %9 = vsyncpa [#allocation5], 0
    %10 = vsyncpa [#allocation4], 0
    // Predicated region
    $region2: #{tpu_custom_call.1} parent=1 // pred_check
      _
    $region3: #{tpu_custom_call.1} parent=1 // pred_check_branch
      %12 = sbr.rel (0) target = $region5
    $region4: #{tpu_custom_call.1} parent=1 // pred_region
      %s14 = ssub.s32 16, 16
      %15 = vsyncadd [#allocation5], %s14
      %s17 = sshll.u32 %s0, 4
      %s18 = int_to_ptr.vmem [resolvable:$true] %s17
      %20 = dma.vmem_to_smem %s18, 16, [#allocation3], [#allocation5]
    $region5: #{tpu_custom_call.1} parent=1 // pred_fallthru
      _
    // Predicated region
    $region6: #{tpu_custom_call.1} parent=1 // pred_check
      _
    $region7: #{tpu_custom_call.1} parent=1 // pred_check_branch
      %22 = sbr.rel (0) target = $region9
    $region8: #{tpu_custom_call.1} parent=1 // pred_region
      _
    $region9: #{tpu_custom_call.1} parent=1 // pred_fallthru
      _
    // Predicated region
    $region10: #{tpu_custom_call.1} parent=1 // pred_check
      _
    $region11: #{tpu_custom_call.1} parent=1 // pred_check_branch
      %24 = sbr.rel (0) target = $region13
    $region12: #{tpu_custom_call.1} parent=1 // pred_region
      _
    $region13: #{tpu_custom_call.1} parent=1 // pred_fallthru
      _
    // Predicated region
    $region14: #{tpu_custom_call.1} parent=1 // pred_check
      _
    $region15: #{tpu_custom_call.1} parent=1 // pred_check_branch
      %26 = sbr.rel (0) target = $region17
    $region16: #{tpu_custom_call.1} parent=1 // pred_region
      %27 = dma.done [#allocation5], 16
    $region17: #{tpu_custom_call.1} parent=1 // pred_fallthru
      _
    %28 = sfence
    %s29 = sld [smem:[#allocation3]]
    %s30 = sld [smem:[#allocation3 + $0x1]]
    %s31 = sld [smem:[#allocation2]]
    %v32 = vld [vmem:[%s2] sm:$0x1]
    %v33 = vstv %s29
    %v34 = vmul.f32 %v32, %v33
    %v35 = vld [vmem:[%s2 + $0x1] sm:$0x1]
    %v36 = vstv %s30
    %v37 = vmul.f32 %v35, %v36
    %v38 = vadd.f32 %v34, %v37
    %v39 = vstv %s31
    %v40 = vadd.f32 %v38, %v39
    %41 = vst [vmem:[#allocation6] sm:$0x1] %v40
    // Predicated region
    $region18: #{tpu_custom_call.1} parent=1 // pred_check
      _
    $region19: #{tpu_custom_call.1} parent=1 // pred_check_branch
      %43 = sbr.rel (0) target = $region21
    $region20: #{tpu_custom_call.1} parent=1 // pred_region
      %s45 = ssub.s32 16, 16
      %46 = vsyncadd [#allocation4], %s45
      %s48 = sshll.u32 [#allocation6], 4
      %s49 = int_to_ptr.vmem [resolvable:$true] %s48
      %51 = dma.vmem_to_hbm [thread:$0]  %s49, 16, %s3, [#allocation4]
    $region21: #{tpu_custom_call.1} parent=1 // pred_fallthru
      _
    // Predicated region
    $region22: #{tpu_custom_call.1} parent=1 // pred_check
      _
    $region23: #{tpu_custom_call.1} parent=1 // pred_check_branch
      %53 = sbr.rel (0) target = $region25
    $region24: #{tpu_custom_call.1} parent=1 // pred_region
      %54 = dma.done [#allocation4], 16
    $region25: #{tpu_custom_call.1} parent=1 // pred_fallthru
      _
    %55 = vsyncpa [#allocation4], 1
    %56 = vsyncpa [#allocation5], 1

</llo_original>
